<compile_context>
chip_gen: v7x
topology: tpu7x:2x2x1
jax: 0.10.0
libtpu: 0.0.40
codegen_flags: <defaults>
</compile_context>

<pallas_src>
import functools

import jax
import jax.numpy as jnp
from jax import lax
from jax.experimental import pallas as pl
from jax.experimental.pallas import tpu as pltpu

_H1, _H2 = 32, 16  # hidden widths fixed by the PyTorch module


# ---------------------------------------------------------------------------
# Kernel: one batch tile, natural row-major layout (batch on sublanes).
# ---------------------------------------------------------------------------
def _actor_kernel(x_ref, p_ref, o_ref, *, dim_state, dim_action):
    """x_ref : (TB, D)   natural layout batch tile
       p_ref : (R, C)    packed parameter blob (VMEM-resident across the grid)
       o_ref : (TB, A)   output tile, written directly in (batch, action) layout
    """
    D, A = dim_state, dim_action
    rb = _H1 + _H2 + A  # first bias row

    # Static sub-views of the packed blob (PyTorch (out, in) weight layout).
    w1 = p_ref[0:_H1, 0:D]                      # (32, D)
    w2 = p_ref[_H1:_H1 + _H2, 0:_H1]            # (16, 32)
    w3 = p_ref[_H1 + _H2:_H1 + _H2 + A, 0:_H2]  # (A, 16)
    b1 = p_ref[rb:rb + 1, 0:_H1]                # (1, 32) -> broadcasts over rows
    b2 = p_ref[rb + 1:rb + 2, 0:_H2]            # (1, 16)
    b3 = p_ref[rb + 2:rb + 3, 0:A]              # (1, A)

    x = x_ref[...]                               # (TB, D)

    # Every layer is  h = x @ W.T + b : contract last dims (rhs-transposed
    # matmul).  The MXU handles the weight "transpose"; no data movement.
    dn = (((1,), (1,)), ((), ()))

    h1 = lax.dot_general(x, w1, dn, preferred_element_type=jnp.float32) + b1
    h1 = jnp.maximum(h1, 0.0)                    # (TB, 32)
    h2 = lax.dot_general(h1, w2, dn, preferred_element_type=jnp.float32) + b2
    h2 = jnp.maximum(h2, 0.0)                    # (TB, 16)
    z = lax.dot_general(h2, w3, dn, preferred_element_type=jnp.float32) + b3

    # sigmoid(z) == 0.5 * (tanh(z/2) + 1): single EUP transcendental, stable.
    o_ref[...] = (0.5 * (jnp.tanh(0.5 * z) + 1.0)).astype(o_ref.dtype)


# ---------------------------------------------------------------------------
# Batch tile selection (review items 2 & 3).
# ---------------------------------------------------------------------------
def _round_up(x, m):
    return ((x + m - 1) // m) * m


def _select_batch_tile(B, tb_max):
    if B < 256:
        return B                                  # single full-extent tile
    if B <= 2 * tb_max:
        return _round_up(pl.cdiv(B, 2), 8)        # exactly 2 steps (v7x 2-TC)
    n = pl.cdiv(B, tb_max)
    n += n % 2                                    # even step count for v7x
    return _round_up(pl.cdiv(B, n), 8)


# ---------------------------------------------------------------------------
# Wrapper: (B, dim_state) -> (B, dim_action), matching PyTorch Actor.forward.
# ---------------------------------------------------------------------------
def actor_forward(x, params_blob, dim_state, dim_action, *,
                  tb_max=4096, input_buffering=2):
    B, D_in = x.shape
    D, A = dim_state, dim_action
    assert D_in == D, (D_in, D)

    # Guard the hard-coded packing layout (review correctness concern).
    R_exp, C_exp = _H1 + _H2 + A + 3, max(D, _H1, A)
    assert params_blob.shape == (R_exp, C_exp), (params_blob.shape, (R_exp, C_exp))
    R, C = params_blob.shape

    TB = _select_batch_tile(B, tb_max)
    n_tiles = pl.cdiv(B, TB)                      # ragged last tile is OK

    kernel = functools.partial(_actor_kernel, dim_state=D, dim_action=A)

    # Optional deeper input pipelining (sweep knob; default = double buffering).
    x_spec_kwargs = {}
    if input_buffering != 2:
        x_spec_kwargs["pipeline_mode"] = pl.Buffered(input_buffering)
    x_spec = pl.BlockSpec((TB, D), lambda i: (i, 0), **x_spec_kwargs)

    cost = pl.CostEstimate(
        flops=2 * B * (D * _H1 + _H1 * _H2 + _H2 * A),
        transcendentals=B * A,
        bytes_accessed=4 * (B * D + B * A + R * C),
    )

    return pl.pallas_call(
        kernel,
        out_shape=jax.ShapeDtypeStruct((B, A), jnp.float32),
        grid_spec=pltpu.PrefetchScalarGridSpec(
            num_scalar_prefetch=0,
            grid=(n_tiles,),
            in_specs=[
                x_spec,                                     # batch tile
                pl.BlockSpec((R, C), lambda i: (0, 0)),     # params stay resident
            ],
            out_specs=pl.BlockSpec((TB, A), lambda i: (i, 0)),
        ),
        compiler_params=pltpu.CompilerParams(
            dimension_semantics=("parallel",),              # megacore / v7x split
        ),
        cost_estimate=cost,
    )(x, params_blob)


# ---------------------------------------------------------------------------
# Parameter init (PyTorch default U(-1/sqrt(fan_in), +1/sqrt(fan_in))),
# packed into one blob of shape (32+16+A+3, max(D,32,A)):
#   rows  0:32        -> W1 (32, D)
#   rows 32:48        -> W2 (16, 32)
#   rows 48:48+A      -> W3 (A, 16)
#   row  48+A         -> b1 (cols 0:32)
#   row  48+A+1       -> b2 (cols 0:16)
#   row  48+A+2       -> b3 (cols 0:A)
# ---------------------------------------------------------------------------
def init_actor_params(key, dim_state, dim_action):
    D, A = dim_state, dim_action
    R, C = _H1 + _H2 + A + 3, max(D, _H1, A)
    blob = jnp.zeros((R, C), jnp.float32)

    rb = _H1 + _H2 + A
    layers = [  # (w_row0, b_row, fan_out, fan_in)
        (0, rb, _H1, D),
        (_H1, rb + 1, _H2, _H1),
        (_H1 + _H2, rb + 2, A, _H2),
    ]
    for w_row0, b_row, fan_out, fan_in in layers:
        key, kw, kb = jax.random.split(key, 3)
        bound = 1.0 / (fan_in ** 0.5)
        w = jax.random.uniform(kw, (fan_out, fan_in), jnp.float32, -bound, bound)
        b = jax.random.uniform(kb, (fan_out,), jnp.float32, -bound, bound)
        blob = blob.at[w_row0:w_row0 + fan_out, 0:fan_in].set(w)
        blob = blob.at[b_row, 0:fan_out].set(b)
    return blob


# ---------------------------------------------------------------------------
# Pure-JAX reference for correctness checking
# ---------------------------------------------------------------------------
def actor_reference(x, blob, dim_state, dim_action):
    D, A = dim_state, dim_action
    rb = _H1 + _H2 + A
    w1, b1 = blob[0:_H1, 0:D], blob[rb, 0:_H1]
    w2, b2 = blob[_H1:_H1 + _H2, 0:_H1], blob[rb + 1, 0:_H2]
    w3, b3 = blob[_H1 + _H2:_H1 + _H2 + A, 0:_H2], blob[rb + 2, 0:A]
    h = jnp.maximum(x @ w1.T + b1, 0.0)
    h = jnp.maximum(h @ w2.T + b2, 0.0)
    return jax.nn.sigmoid(h @ w3.T + b3)


if __name__ == "__main__":
    key = jax.random.PRNGKey(0)
    dim_state, dim_action = 8, 4
    k_p, k_x1, k_x2 = jax.random.split(key, 3)
    blob = init_actor_params(k_p, dim_state, dim_action)

    # --- small batch: single full-extent tile ----------------------------
    x1 = jax.random.normal(k_x1, (16, dim_state), jnp.float32)
    out1 = jax.block_until_ready(actor_forward(x1, blob, dim_state, dim_action))
    ref1 = actor_reference(x1, blob, dim_state, dim_action)
    assert out1.shape == (16, dim_action), out1.shape
    assert jnp.allclose(out1, ref1, atol=1e-4, rtol=1e-4), "mismatch (small batch)"

    # --- medium batch: exactly 2 grid steps (v7x 2-TC split), ragged tile -
    x2 = jax.random.normal(k_x2, (600, dim_state), jnp.float32)
    out2 = jax.block_until_ready(actor_forward(x2, blob, dim_state, dim_action))
    ref2 = actor_reference(x2, blob, dim_state, dim_action)
    assert out2.shape == (600, dim_action), out2.shape
    assert jnp.allclose(out2, ref2, atol=1e-4, rtol=1e-4), "mismatch (2-step grid)"

    # --- large-batch code path exercised at small scale (forced tiny tile) -
    out3 = jax.block_until_ready(
        actor_forward(x2, blob, dim_state, dim_action, tb_max=128))
    assert jnp.allclose(out3, ref2, atol=1e-4, rtol=1e-4), "mismatch (multi-step grid)"

    print("KERNEL_OK")
</pallas_src>

<mosaic_0001>
module attributes {stable_mosaic.version = 11 : i64} {
  func.func @_actor_kernel(%arg0: i32, %arg1: memref<16x8xf32, #tpu.memory_space<vmem>>, %arg2: memref<55x32xf32, #tpu.memory_space<vmem>>, %arg3: memref<16x4xf32, #tpu.memory_space<vmem>>) attributes {dimension_semantics = [#tpu.dimension_semantics<parallel>], iteration_bounds = array<i64: 1>, scalar_prefetch = 0 : i64, scratch_operands = 0 : i64, tpu.core_type = #tpu.core_type<tc>, window_params = [{transform_indices = @transform_0, window_bounds = array<i64: 16, 8>}, {pipeline_mode = #tpu.pipeline_mode<synchronous>, transform_indices = @transform_1, window_bounds = array<i64: 55, 32>}, {transform_indices = @transform_2, window_bounds = array<i64: 16, 4>}]} {
    %c0 = arith.constant 0 : index
    %c0_0 = arith.constant 0 : index
    %0 = vector.load %arg2[%c0, %c0_0] : memref<55x32xf32, #tpu.memory_space<vmem>>, vector<32x8xf32>
    %c32 = arith.constant 32 : index
    %c0_1 = arith.constant 0 : index
    %1 = vector.load %arg2[%c32, %c0_1] : memref<55x32xf32, #tpu.memory_space<vmem>>, vector<16x32xf32>
    %c48 = arith.constant 48 : index
    %c0_2 = arith.constant 0 : index
    %2 = vector.load %arg2[%c48, %c0_2] : memref<55x32xf32, #tpu.memory_space<vmem>>, vector<4x16xf32>
    %c52 = arith.constant 52 : index
    %c0_3 = arith.constant 0 : index
    %3 = vector.load %arg2[%c52, %c0_3] : memref<55x32xf32, #tpu.memory_space<vmem>>, vector<1x32xf32>
    %c53 = arith.constant 53 : index
    %c0_4 = arith.constant 0 : index
    %4 = vector.load %arg2[%c53, %c0_4] : memref<55x32xf32, #tpu.memory_space<vmem>>, vector<1x16xf32>
    %c54 = arith.constant 54 : index
    %c0_5 = arith.constant 0 : index
    %5 = vector.load %arg2[%c54, %c0_5] : memref<55x32xf32, #tpu.memory_space<vmem>>, vector<1x4xf32>
    %c0_6 = arith.constant 0 : index
    %c0_7 = arith.constant 0 : index
    %6 = vector.load %arg1[%c0_6, %c0_7] : memref<16x8xf32, #tpu.memory_space<vmem>>, vector<16x8xf32>
    %cst = arith.constant dense<0.000000e+00> : vector<16x32xf32>
    %7 = tpu.matmul %6, %0, %cst {dimension_numbers = #tpu.dot_dimension_numbers<[1], [1], [0], [0], [0, 0, 1, 0], [], []>} : vector<16x8xf32>, vector<32x8xf32>, vector<16x32xf32> -> vector<16x32xf32>
    %8 = vector.broadcast %3 : vector<1x32xf32> to vector<16x32xf32>
    %9 = arith.addf %7, %8 : vector<16x32xf32>
    %cst_8 = arith.constant 0.000000e+00 : f32
    %10 = vector.broadcast %cst_8 : f32 to vector<16x32xf32>
    %11 = arith.maximumf %9, %10 : vector<16x32xf32>
    %cst_9 = arith.constant dense<0.000000e+00> : vector<16x16xf32>
    %12 = tpu.matmul %11, %1, %cst_9 {dimension_numbers = #tpu.dot_dimension_numbers<[1], [1], [0], [0], [0, 0, 1, 0], [], []>} : vector<16x32xf32>, vector<16x32xf32>, vector<16x16xf32> -> vector<16x16xf32>
    %13 = vector.broadcast %4 : vector<1x16xf32> to vector<16x16xf32>
    %14 = arith.addf %12, %13 : vector<16x16xf32>
    %cst_10 = arith.constant 0.000000e+00 : f32
    %15 = vector.broadcast %cst_10 : f32 to vector<16x16xf32>
    %16 = arith.maximumf %14, %15 : vector<16x16xf32>
    %cst_11 = arith.constant dense<0.000000e+00> : vector<16x4xf32>
    %17 = tpu.matmul %16, %2, %cst_11 {dimension_numbers = #tpu.dot_dimension_numbers<[1], [1], [0], [0], [0, 0, 1, 0], [], []>} : vector<16x16xf32>, vector<4x16xf32>, vector<16x4xf32> -> vector<16x4xf32>
    %18 = vector.broadcast %5 : vector<1x4xf32> to vector<16x4xf32>
    %19 = arith.addf %17, %18 : vector<16x4xf32>
    %cst_12 = arith.constant 5.000000e-01 : f32
    %20 = vector.broadcast %cst_12 : f32 to vector<16x4xf32>
    %21 = arith.mulf %20, %19 : vector<16x4xf32>
    %22 = math.tanh %21 : vector<16x4xf32>
    %cst_13 = arith.constant 1.000000e+00 : f32
    %23 = vector.broadcast %cst_13 : f32 to vector<16x4xf32>
    %24 = arith.addf %22, %23 : vector<16x4xf32>
    %cst_14 = arith.constant 5.000000e-01 : f32
    %25 = vector.broadcast %cst_14 : f32 to vector<16x4xf32>
    %26 = arith.mulf %25, %24 : vector<16x4xf32>
    %c0_15 = arith.constant 0 : index
    %c0_16 = arith.constant 0 : index
    %27 = vector.load %arg3[%c0_15, %c0_16] : memref<16x4xf32, #tpu.memory_space<vmem>>, vector<16x4xf32>
    tpu.vector_store %arg3[%c0_15, %c0_16], %26 {strides = array<i32>} : memref<16x4xf32, #tpu.memory_space<vmem>>, vector<16x4xf32>,
    return
  }
  func.func @transform_0(%arg0: i32) -> (i32, i32) {
    %c0_i32 = arith.constant 0 : i32
    %c0_i32_0 = arith.constant 0 : i32
    return %arg0, %c0_i32 : i32, i32
  }
  func.func @transform_1(%arg0: i32) -> (i32, i32) {
    %c0_i32 = arith.constant 0 : i32
    %c0_i32_0 = arith.constant 0 : i32
    %c0_i32_1 = arith.constant 0 : i32
    return %c0_i32, %c0_i32_0 : i32, i32
  }
  func.func @transform_2(%arg0: i32) -> (i32, i32) {
    %c0_i32 = arith.constant 0 : i32
    %c0_i32_0 = arith.constant 0 : i32
    return %arg0, %c0_i32 : i32, i32
  }
}

</mosaic_0001>

<llo_original>
// kernel: tpu_custom_call.1
$region0: #{tpu_custom_call.1}
  #allocation0 [shape = 'u32[]', space=smem, size = 0x4, offset = 0x4, fixed_abs, tag = 'smem constant byte address 0x4 - core index']
  #allocation1 [shape = 'u32[144,128]{1,0:T(1,128)}', space=vmem, size = 0x12000, scoped, tag = 'internal scratch']
  %s0 = inlined_call_operand.vmem [shape: f32[16,8], index: 0, kind: input, shape index: {}]
  %s1 = inlined_call_operand.vmem [shape: f32[55,32], index: 1, kind: input, shape index: {}]
  %s2 = inlined_call_operand.vmem [shape: f32[16,4], index: 2, kind: output, shape index: {}]
  %s3 = sld [smem:[#allocation0]]
  $region18: #{tpu_custom_call.1} parent=0
    _
  %s5 = ssub.s32 1, %s3
  %s6 = scalar_select 0, %s5, %s3
  // Predicated region
  $region2: #{tpu_custom_call.1} parent=0 // pred_check
    _
  $region3: #{tpu_custom_call.1} parent=0 // pred_check_branch
    %8 = sbr.rel (0) target = $region5
  $region4: #{tpu_custom_call.1} parent=0 // pred_region
    _
  $region5: #{tpu_custom_call.1} parent=0 // pred_fallthru
    _
  // Predicated region
  $region6: #{tpu_custom_call.1} parent=0 // pred_check
    _
  $region7: #{tpu_custom_call.1} parent=0 // pred_check_branch
    %10 = sbr.rel (0) target = $region9
  $region8: #{tpu_custom_call.1} parent=0 // pred_region
    _
  $region9: #{tpu_custom_call.1} parent=0 // pred_fallthru
    _
  %v11 = vld [vmem:[%s1] sm:$0xff]
  %v12 = vld [vmem:[%s1 + $0x8] sm:$0xff]
  %v13 = vld [vmem:[%s1 + $0x10] sm:$0xff]
  %v14 = vld [vmem:[%s1 + $0x18] sm:$0xff]
  %v15 = vld [vmem:[%s1 + $0x20] sm:$0xff]
  %v16 = vld [vmem:[%s1 + $0x28] sm:$0xff]
  %v17 = vld [vmem:[%s1 + $0x30] sm:$0xf]
  %v18 = vld [vmem:[%s1 + $0x34] sm:$0x1]
  %v19 = vld [vmem:[%s1 + $0x35] sm:$0x1]
  %v20 = vld [vmem:[%s1 + $0x36] sm:$0x1]
  %v21 = vld [vmem:[%s0] sm:$0xff]
  %v22 = vld [vmem:[%s0 + $0x8] sm:$0xff]
  %v23 = vlaneseq
  %v24 = vshrl.u32 %v23, 7
  %v25 = vsub.s32 0, %v24
  %v26 = vrot.slane %v18, %v25
  %vm27 = vcmask 64512
  %v29 = vsel %vm27, %v21, 0
  %v32 = vsel %vm27, %v22, 0
  %v35 = vsel %vm27, %v11, 0
  %v38 = vsel %vm27, %v12, 0
  %v41 = vsel %vm27, %v13, 0
  %v44 = vsel %vm27, %v14, 0
  %46 = vmatprep.subr.mxu0 0.0
  %47 = vmatpush1.xpose.msra.mxu0 %v35
  %48 = vmatprep.subr.mxu0 0.0
  %49 = vmatpush1.xpose.msra.mxu0 %v38
  %50 = vmatprep.subr.mxu0 0.0
  %51 = vmatpush1.xpose.msra.mxu0 %v41
  %52 = vmatprep.subr.mxu0 0.0
  %53 = vmatpush1.xpose.msra.mxu0 %v44
  %54 = vmatprep.subr.mxu0 0.0
  %55 = vmatpush1.xpose.msra.mxu0 0.0
  %56 = vmatprep.subr.mxu0 0.0
  %57 = vmatpush1.xpose.msra.mxu0 0.0
  %58 = vmatprep.subr.mxu0 0.0
  %59 = vmatpush1.xpose.msra.mxu0 0.0
  %60 = vmatprep.subr.mxu0 0.0
  %61 = vmatpush1.xpose.msra.mxu0 0.0
  %62 = vmatprep.subr.mxu0 0.0
  %63 = vmatpush1.xpose.msra.mxu0 0.0
  %64 = vmatprep.subr.mxu0 0.0
  %65 = vmatpush1.xpose.msra.mxu0 0.0
  %66 = vmatprep.subr.mxu0 0.0
  %67 = vmatpush1.xpose.msra.mxu0 0.0
  %68 = vmatprep.subr.mxu0 0.0
  %69 = vmatpush1.xpose.msra.mxu0 0.0
  %70 = vmatprep.subr.mxu0 0.0
  %71 = vmatpush1.xpose.msra.mxu0 0.0
  %72 = vmatprep.subr.mxu0 0.0
  %73 = vmatpush1.xpose.msra.mxu0 0.0
  %74 = vmatprep.subr.mxu0 0.0
  %75 = vmatpush1.xpose.msra.mxu0 0.0
  %76 = vmatprep.subr.mxu0 0.0
  %77 = vmatpush1.xpose.msra.mxu0 0.0
  %78 = vmatprep.subr.mxu0 0.0
  %79 = vmatpush1.xpose.msra.mxu0 0.0
  %80 = vmatprep.subr.mxu0 0.0
  %81 = vmatpush1.xpose.msra.mxu0 0.0
  %82 = vmatprep.subr.mxu0 0.0
  %83 = vmatpush1.xpose.msra.mxu0 0.0
  %84 = vmatprep.subr.mxu0 0.0
  %85 = vmatpush1.xpose.msra.mxu0 0.0
  %86 = vmatprep.subr.mxu0 0.0
  %87 = vmatpush1.xpose.msra.mxu0 0.0
  %88 = vmatprep.subr.mxu0 0.0
  %89 = vmatpush1.xpose.msra.mxu0 0.0
  %90 = vmatprep.subr.mxu0 0.0
  %91 = vmatpush1.xpose.msra.mxu0 0.0
  %92 = vmatprep.subr.mxu0 0.0
  %93 = vmatpush1.xpose.msra.mxu0 0.0
  %94 = vmatprep.subr.mxu0 0.0
  %95 = vmatpush1.xpose.msra.mxu0 0.0
  %96 = vmatprep.subr.mxu0 0.0
  %97 = vmatpush1.xpose.msra.mxu0 0.0
  %98 = vmatprep.subr.mxu0 0.0
  %99 = vmatpush1.xpose.msra.mxu0 0.0
  %100 = vmatprep.subr.mxu0 0.0
  %101 = vmatpush1.xpose.msra.mxu0 0.0
  %102 = vmatprep.subr.mxu0 0.0
  %103 = vmatpush1.xpose.msra.mxu0 0.0
  %104 = vmatprep.subr.mxu0 0.0
  %105 = vmatpush1.xpose.msra.mxu0 0.0
  %106 = vmatprep.subr.mxu0 0.0
  %107 = vmatpush1.xpose.msra.mxu0 0.0
  %108 = vmatprep.subr.mxu0 0.0
  %109 = vmatpush1.xpose.msra.mxu0 0.0
  %110 = vmatprep.mubr.f32.mxu0 0.0
  %111 = vmatmul.mubr.f32.gmra.mrb[0].mxu0 %v29
  %v112 = vpop.f32.mrb[0].mxu0
  %v113 = vadd.f32 %v26, %v112
  %v114 = vpop.f32.mrb[0].mxu0
  %115 = vmatprep.mubr.f32.mxu0 0.0
  %116 = vmatmul.mubr.f32.gmra.mrb[0].mxu0 %v32
  %v117 = vpop.f32.mrb[0].mxu0
  %v118 = vadd.f32 %v26, %v117
  %v119 = vpop.f32.mrb[0].mxu0
  %120 = vdwg.mxu0
  %v121 = vmax.f32 %v113, 0.0
  %v122 = vmax.f32 %v118, 0.0
  %v123 = vlaneseq
  %v124 = vshrl.u32 %v123, 7
  %v125 = vsub.s32 0, %v124
  %v126 = vrot.slane %v19, %v125
  %vm127 = vcmask 261120
  %v129 = vsel %vm127, %v121, 0
  %v132 = vsel %vm127, %v122, 0
  %v135 = vsel %vm127, %v15, 0
  %v138 = vsel %vm127, %v16, 0
  %140 = vmatprep.subr.mxu0 0.0
  %141 = vmatpush1.xpose.msra.mxu0 %v135
  %142 = vmatprep.subr.mxu0 0.0
  %143 = vmatpush1.xpose.msra.mxu0 %v138
  %144 = vmatprep.subr.mxu0 0.0
  %145 = vmatpush1.xpose.msra.mxu0 0.0
  %146 = vmatprep.subr.mxu0 0.0
  %147 = vmatpush1.xpose.msra.mxu0 0.0
  %148 = vmatprep.subr.mxu0 0.0
  %149 = vmatpush1.xpose.msra.mxu0 0.0
  %150 = vmatprep.subr.mxu0 0.0
  %151 = vmatpush1.xpose.msra.mxu0 0.0
  %152 = vmatprep.subr.mxu0 0.0
  %153 = vmatpush1.xpose.msra.mxu0 0.0
  %154 = vmatprep.subr.mxu0 0.0
  %155 = vmatpush1.xpose.msra.mxu0 0.0
  %156 = vmatprep.subr.mxu0 0.0
  %157 = vmatpush1.xpose.msra.mxu0 0.0
  %158 = vmatprep.subr.mxu0 0.0
  %159 = vmatpush1.xpose.msra.mxu0 0.0
  %160 = vmatprep.subr.mxu0 0.0
  %161 = vmatpush1.xpose.msra.mxu0 0.0
  %162 = vmatprep.subr.mxu0 0.0
  %163 = vmatpush1.xpose.msra.mxu0 0.0
  %164 = vmatprep.subr.mxu0 0.0
  %165 = vmatpush1.xpose.msra.mxu0 0.0
  %166 = vmatprep.subr.mxu0 0.0
  %167 = vmatpush1.xpose.msra.mxu0 0.0
  %168 = vmatprep.subr.mxu0 0.0
  %169 = vmatpush1.xpose.msra.mxu0 0.0
  %170 = vmatprep.subr.mxu0 0.0
  %171 = vmatpush1.xpose.msra.mxu0 0.0
  %172 = vmatprep.subr.mxu0 0.0
  %173 = vmatpush1.xpose.msra.mxu0 0.0
  %174 = vmatprep.subr.mxu0 0.0
  %175 = vmatpush1.xpose.msra.mxu0 0.0
  %176 = vmatprep.subr.mxu0 0.0
  %177 = vmatpush1.xpose.msra.mxu0 0.0
  %178 = vmatprep.subr.mxu0 0.0
  %179 = vmatpush1.xpose.msra.mxu0 0.0
  %180 = vmatprep.subr.mxu0 0.0
  %181 = vmatpush1.xpose.msra.mxu0 0.0
  %182 = vmatprep.subr.mxu0 0.0
  %183 = vmatpush1.xpose.msra.mxu0 0.0
  %184 = vmatprep.subr.mxu0 0.0
  %185 = vmatpush1.xpose.msra.mxu0 0.0
  %186 = vmatprep.subr.mxu0 0.0
  %187 = vmatpush1.xpose.msra.mxu0 0.0
  %188 = vmatprep.subr.mxu0 0.0
  %189 = vmatpush1.xpose.msra.mxu0 0.0
  %190 = vmatprep.subr.mxu0 0.0
  %191 = vmatpush1.xpose.msra.mxu0 0.0
  %192 = vmatprep.subr.mxu0 0.0
  %193 = vmatpush1.xpose.msra.mxu0 0.0
  %194 = vmatprep.subr.mxu0 0.0
  %195 = vmatpush1.xpose.msra.mxu0 0.0
  %196 = vmatprep.subr.mxu0 0.0
  %197 = vmatpush1.xpose.msra.mxu0 0.0
  %198 = vmatprep.subr.mxu0 0.0
  %199 = vmatpush1.xpose.msra.mxu0 0.0
  %200 = vmatprep.subr.mxu0 0.0
  %201 = vmatpush1.xpose.msra.mxu0 0.0
  %202 = vmatprep.subr.mxu0 0.0
  %203 = vmatpush1.xpose.msra.mxu0 0.0
  %204 = vmatprep.mubr.f32.mxu0 0.0
  %205 = vmatmul.mubr.f32.gmra.mrb[0].mxu0 %v129
  %v206 = vpop.f32.mrb[0].mxu0
  %v207 = vadd.f32 %v126, %v206
  %v208 = vpop.f32.mrb[0].mxu0
  %209 = vmatprep.mubr.f32.mxu0 0.0
  %210 = vmatmul.mubr.f32.gmra.mrb[0].mxu0 %v132
  %v211 = vpop.f32.mrb[0].mxu0
  %v212 = vadd.f32 %v126, %v211
  %v213 = vpop.f32.mrb[0].mxu0
  %214 = vdwg.mxu0
  %v215 = vmax.f32 %v207, 0.0
  %v216 = vmax.f32 %v212, 0.0
  %v217 = vlaneseq
  %v218 = vshrl.u32 %v217, 7
  %v219 = vsub.s32 0, %v218
  %v220 = vrot.slane %v20, %v219
  %vm221 = vcmask 130048
  %v223 = vsel %vm221, %v215, 0
  %v226 = vsel %vm221, %v216, 0
  %v229 = vsel %vm221, %v17, 0
  %231 = vmatprep.subr.mxu0 0.0
  %232 = vmatpush1.xpose.msra.mxu0 %v229
  %233 = vmatprep.subr.mxu0 0.0
  %234 = vmatpush1.xpose.msra.mxu0 0.0
  %235 = vmatprep.subr.mxu0 0.0
  %236 = vmatpush1.xpose.msra.mxu0 0.0
  %237 = vmatprep.subr.mxu0 0.0
  %238 = vmatpush1.xpose.msra.mxu0 0.0
  %239 = vmatprep.subr.mxu0 0.0
  %240 = vmatpush1.xpose.msra.mxu0 0.0
  %241 = vmatprep.subr.mxu0 0.0
  %242 = vmatpush1.xpose.msra.mxu0 0.0
  %243 = vmatprep.subr.mxu0 0.0
  %244 = vmatpush1.xpose.msra.mxu0 0.0
  %245 = vmatprep.subr.mxu0 0.0
  %246 = vmatpush1.xpose.msra.mxu0 0.0
  %247 = vmatprep.subr.mxu0 0.0
  %248 = vmatpush1.xpose.msra.mxu0 0.0
  %249 = vmatprep.subr.mxu0 0.0
  %250 = vmatpush1.xpose.msra.mxu0 0.0
  %251 = vmatprep.subr.mxu0 0.0
  %252 = vmatpush1.xpose.msra.mxu0 0.0
  %253 = vmatprep.subr.mxu0 0.0
  %254 = vmatpush1.xpose.msra.mxu0 0.0
  %255 = vmatprep.subr.mxu0 0.0
  %256 = vmatpush1.xpose.msra.mxu0 0.0
  %257 = vmatprep.subr.mxu0 0.0
  %258 = vmatpush1.xpose.msra.mxu0 0.0
  %259 = vmatprep.subr.mxu0 0.0
  %260 = vmatpush1.xpose.msra.mxu0 0.0
  %261 = vmatprep.subr.mxu0 0.0
  %262 = vmatpush1.xpose.msra.mxu0 0.0
  %263 = vmatprep.subr.mxu0 0.0
  %264 = vmatpush1.xpose.msra.mxu0 0.0
  %265 = vmatprep.subr.mxu0 0.0
  %266 = vmatpush1.xpose.msra.mxu0 0.0
  %267 = vmatprep.subr.mxu0 0.0
  %268 = vmatpush1.xpose.msra.mxu0 0.0
  %269 = vmatprep.subr.mxu0 0.0
  %270 = vmatpush1.xpose.msra.mxu0 0.0
  %271 = vmatprep.subr.mxu0 0.0
  %272 = vmatpush1.xpose.msra.mxu0 0.0
  %273 = vmatprep.subr.mxu0 0.0
  %274 = vmatpush1.xpose.msra.mxu0 0.0
  %275 = vmatprep.subr.mxu0 0.0
  %276 = vmatpush1.xpose.msra.mxu0 0.0
  %277 = vmatprep.subr.mxu0 0.0
  %278 = vmatpush1.xpose.msra.mxu0 0.0
  %279 = vmatprep.subr.mxu0 0.0
  %280 = vmatpush1.xpose.msra.mxu0 0.0
  %281 = vmatprep.subr.mxu0 0.0
  %282 = vmatpush1.xpose.msra.mxu0 0.0
  %283 = vmatprep.subr.mxu0 0.0
  %284 = vmatpush1.xpose.msra.mxu0 0.0
  %285 = vmatprep.subr.mxu0 0.0
  %286 = vmatpush1.xpose.msra.mxu0 0.0
  %287 = vmatprep.subr.mxu0 0.0
  %288 = vmatpush1.xpose.msra.mxu0 0.0
  %289 = vmatprep.subr.mxu0 0.0
  %290 = vmatpush1.xpose.msra.mxu0 0.0
  %291 = vmatprep.subr.mxu0 0.0
  %292 = vmatpush1.xpose.msra.mxu0 0.0
  %293 = vmatprep.subr.mxu0 0.0
  %294 = vmatpush1.xpose.msra.mxu0 0.0
  %295 = vmatprep.mubr.f32.mxu0 0.0
  %296 = vmatmul.mubr.f32.gmra.mrb[0].mxu0 %v223
  %v297 = vpop.f32.mrb[0].mxu0
  %v298 = vadd.f32 %v220, %v297
  %v299 = vpop.f32.mrb[0].mxu0
  %300 = vmatprep.mubr.f32.mxu0 0.0
  %301 = vmatmul.mubr.f32.gmra.mrb[0].mxu0 %v226
  %v302 = vpop.f32.mrb[0].mxu0
  %v303 = vadd.f32 %v220, %v302
  %v304 = vpop.f32.mrb[0].mxu0
  %305 = vdwg.mxu0
  %v306 = vmul.f32 %v298, 0.5
  %v307 = vmul.f32 %v303, 0.5
  %v308 = vtanh.pop %v306
  %v309 = vtanh.pop %v307
  %v310 = vadd.f32 %v308, 1.0
  %v311 = vadd.f32 %v309, 1.0
  %v312 = vmul.f32 %v310, 0.5
  %v313 = vmul.f32 %v311, 0.5
  %vm314 = vcmask 31744
  %315 = vst.msk [vmem:[%s2] sm:$0xff] %vm314, %v312
  %316 = vst.msk [vmem:[%s2 + $0x8] sm:$0xff] %vm314, %v313
  // Predicated region
  $region10: #{tpu_custom_call.1} parent=0 // pred_check
    _
  $region11: #{tpu_custom_call.1} parent=0 // pred_check_branch
    %318 = sbr.rel (0) target = $region13
  $region12: #{tpu_custom_call.1} parent=0 // pred_region
    _
  $region13: #{tpu_custom_call.1} parent=0 // pred_fallthru
    _
  // Predicated region
  $region14: #{tpu_custom_call.1} parent=0 // pred_check
    _
  $region15: #{tpu_custom_call.1} parent=0 // pred_check_branch
    %320 = sbr.rel (0) target = $region17
  $region16: #{tpu_custom_call.1} parent=0 // pred_region
    _
  $region17: #{tpu_custom_call.1} parent=0 // pred_fallthru
    _

</llo_original>
